<compile_context>
chip_gen: v6e
topology: v6e:2x2x1
jax: 0.10.0
libtpu: 0.0.40
codegen_flags: <defaults>
</compile_context>

<pallas_src>
import jax
import jax.numpy as jnp
from jax.experimental import pallas as pl
from jax.experimental.pallas import tpu as pltpu

_LANE = 128
_TARGET_TILE_BYTES = 4 << 20  # ~4 MiB per input ref per grid step


def _max_kernel(a_ref, b_ref, o_ref):
    # max(a + a, b + b) == 2 * max(a, b) exactly (see header comment).
    m = jnp.maximum(a_ref[...], b_ref[...])
    o_ref[...] = m + m


def _sublane_multiple(dtype):
    # Second-to-last block dim must respect dtype packing: f32->8, bf16->16, int8->32.
    itemsize = jnp.dtype(dtype).itemsize
    return {4: 8, 2: 16, 1: 32}.get(itemsize, 8)


def _pick_width(n):
    """Pick a wide, lane-dense last dim; avoid padding when a candidate divides n."""
    for w in (4096, 2048, 1024, 512, 256, 128):
        if n % w == 0:
            return w, n
    w = 1024 if n >= 1024 else _LANE
    padded = ((n + w - 1) // w) * w
    return w, padded


def simple_max(a, b):
    """Pallas TPU implementation of SimpleMaxModule.forward: max(a + a, b + b)."""
    assert a.shape == b.shape and a.dtype == b.dtype
    orig_shape = a.shape
    n = a.size
    itemsize = jnp.dtype(a.dtype).itemsize
    sub = _sublane_multiple(a.dtype)

    width, padded = _pick_width(n)
    rows = padded // width

    a_flat = a.reshape(-1)
    b_flat = b.reshape(-1)
    if padded != n:
        # Only materialize padded HBM copies when alignment actually requires it.
        a_flat = jnp.pad(a_flat, (0, padded - n))
        b_flat = jnp.pad(b_flat, (0, padded - n))
    a2 = a_flat.reshape(rows, width)
    b2 = b_flat.reshape(rows, width)

    # Row tile sized to ~_TARGET_TILE_BYTES per ref. If the whole array fits
    # in one tile, use the full array as a single block (full-extent block
    # dims are exempt from the (8,128) divisibility rule).
    target_rows = max(1, _TARGET_TILE_BYTES // (width * itemsize))
    if rows <= target_rows:
        tile_rows = rows
    else:
        tile_rows = max(sub, (target_rows // sub) * sub)

    grid = (pl.cdiv(rows, tile_rows),)
    spec = pl.BlockSpec((tile_rows, width), lambda i: (i, 0))

    out2 = pl.pallas_call(
        _max_kernel,
        out_shape=jax.ShapeDtypeStruct((rows, width), a.dtype),
        grid_spec=pltpu.PrefetchScalarGridSpec(
            num_scalar_prefetch=0,
            grid=grid,
            in_specs=[spec, spec],
            out_specs=spec,
        ),
        compiler_params=pltpu.CompilerParams(
            # "parallel" lets v7x shard the grid loop across its 2 TensorCores.
            dimension_semantics=("parallel",),
            # 3 refs x 2 pipeline buffers x ~4 MiB ≈ 24 MiB resident:
            # raise v5e's 16 MiB scoped default, stay under v7x's 64 MiB physical.
            vmem_limit_bytes=48 << 20,
        ),
    )(a2, b2)

    if padded != n:
        return out2.reshape(-1)[:n].reshape(orig_shape)
    return out2.reshape(orig_shape)


if __name__ == "__main__":
    key = jax.random.PRNGKey(0)
    k1, k2 = jax.random.split(key)
    # Small NCHW shapes consistent with the module (purely elementwise op).
    a = jax.random.normal(k1, (2, 4, 16, 16), dtype=jnp.float32)
    b = jax.random.normal(k2, (2, 4, 16, 16), dtype=jnp.float32)

    out = jax.block_until_ready(simple_max(a, b))

    ref = jnp.maximum(a + a, b + b)
    assert out.shape == ref.shape
    assert jnp.allclose(out, ref), "mismatch vs reference"
    print("KERNEL_OK")
</pallas_src>

<mosaic_0001>
module attributes {stable_mosaic.version = 11 : i64} {
  func.func @_max_kernel(%arg0: i32, %arg1: memref<1x2048xf32, #tpu.memory_space<vmem>>, %arg2: memref<1x2048xf32, #tpu.memory_space<vmem>>, %arg3: memref<1x2048xf32, #tpu.memory_space<vmem>>) attributes {dimension_semantics = [#tpu.dimension_semantics<parallel>], iteration_bounds = array<i64: 1>, scalar_prefetch = 0 : i64, scratch_operands = 0 : i64, tpu.core_type = #tpu.core_type<tc>, window_params = [{transform_indices = @transform_0, window_bounds = array<i64: 1, 2048>}, {transform_indices = @transform_1, window_bounds = array<i64: 1, 2048>}, {transform_indices = @transform_2, window_bounds = array<i64: 1, 2048>}]} {
    %c0 = arith.constant 0 : index
    %c0_0 = arith.constant 0 : index
    %0 = vector.load %arg1[%c0, %c0_0] : memref<1x2048xf32, #tpu.memory_space<vmem>>, vector<1x2048xf32>
    %c0_1 = arith.constant 0 : index
    %c0_2 = arith.constant 0 : index
    %1 = vector.load %arg2[%c0_1, %c0_2] : memref<1x2048xf32, #tpu.memory_space<vmem>>, vector<1x2048xf32>
    %2 = arith.maximumf %0, %1 : vector<1x2048xf32>
    %3 = arith.addf %2, %2 : vector<1x2048xf32>
    %c0_3 = arith.constant 0 : index
    %c0_4 = arith.constant 0 : index
    %4 = vector.load %arg3[%c0_3, %c0_4] : memref<1x2048xf32, #tpu.memory_space<vmem>>, vector<1x2048xf32>
    tpu.vector_store %arg3[%c0_3, %c0_4], %3 {strides = array<i32>} : memref<1x2048xf32, #tpu.memory_space<vmem>>, vector<1x2048xf32>,
    return
  }
  func.func @transform_0(%arg0: i32) -> (i32, i32) {
    %c0_i32 = arith.constant 0 : i32
    %c0_i32_0 = arith.constant 0 : i32
    return %arg0, %c0_i32 : i32, i32
  }
  func.func @transform_1(%arg0: i32) -> (i32, i32) {
    %c0_i32 = arith.constant 0 : i32
    %c0_i32_0 = arith.constant 0 : i32
    return %arg0, %c0_i32 : i32, i32
  }
  func.func @transform_2(%arg0: i32) -> (i32, i32) {
    %c0_i32 = arith.constant 0 : i32
    %c0_i32_0 = arith.constant 0 : i32
    return %arg0, %c0_i32 : i32, i32
  }
}

</mosaic_0001>

<llo_original>
// kernel: tpu_custom_call.1
$region0: #{tpu_custom_call.1}
  #allocation0 [shape = 'u32[]', space=smem, size = 0x4, offset = 0x4, fixed_abs, tag = 'smem constant byte address 0x4 - core index']
  #allocation1 [shape = 'u32[144,128]{1,0:T(1,128)}', space=vmem, size = 0x12000, scoped, tag = 'internal scratch']
  %s0 = inlined_call_operand.hbm [shape: f32[1,2048], index: 0, kind: input, shape index: {}]
  %s1 = inlined_call_operand.hbm [shape: f32[1,2048], index: 1, kind: input, shape index: {}]
  %s2 = inlined_call_operand.hbm [shape: f32[1,2048], index: 2, kind: output, shape index: {}]
  %s3 = sld [smem:[#allocation0]]
  $region26: #{tpu_custom_call.1} parent=0
    _
  %s5 = ssub.s32 1, %s3
  %s6 = scalar_select 0, %s5, %s3
  $region1: #{tpu_custom_call.1} parent=0
    #allocation2 [shape = 'u8[8192]{0}', space=vmem, size = 0x2000, scoped, tag = 'input window, operand 0, single buffered']
    #allocation3 [shape = 's32[1]{0}', space=sflag, size = 0x4, scoped, tag = 'scoped memory for tpu_custom_call.1']
    #allocation4 [shape = 's32[1]{0}', space=sflag, size = 0x4, scoped, tag = 'scoped memory for tpu_custom_call.1']
    #allocation5 [shape = 'u8[8192]{0}', space=vmem, size = 0x2000, scoped, tag = 'input window, operand 1, single buffered']
    #allocation6 [shape = 's32[1]{0}', space=sflag, size = 0x4, scoped, tag = 'scoped memory for tpu_custom_call.1']
    #allocation7 [shape = 'u8[8192]{0}', space=vmem, size = 0x2000, scoped, tag = 'output window, operand 0, single buffered']
    %7 = vsyncpa [#allocation3], 0
    %8 = vsyncpa [#allocation6], 0
    %9 = vsyncpa [#allocation4], 0
    // Predicated region
    $region2: #{tpu_custom_call.1} parent=1 // pred_check
      _
    $region3: #{tpu_custom_call.1} parent=1 // pred_check_branch
      %11 = sbr.rel (0) target = $region5
    $region4: #{tpu_custom_call.1} parent=1 // pred_region
      %s13 = ssub.s32 256, 256
      %14 = vsyncadd [#allocation3], %s13
      %s16 = sshll.u32 [#allocation2], 4
      %s17 = int_to_ptr.vmem [resolvable:$true] %s16
      %19 = dma.hbm_to_vmem [thread:$0]  %s0, 256, %s17, [#allocation3]
    $region5: #{tpu_custom_call.1} parent=1 // pred_fallthru
      _
    // Predicated region
    $region6: #{tpu_custom_call.1} parent=1 // pred_check
      _
    $region7: #{tpu_custom_call.1} parent=1 // pred_check_branch
      %21 = sbr.rel (0) target = $region9
    $region8: #{tpu_custom_call.1} parent=1 // pred_region
      %s23 = ssub.s32 256, 256
      %24 = vsyncadd [#allocation6], %s23
      %s26 = sshll.u32 [#allocation5], 4
      %s27 = int_to_ptr.vmem [resolvable:$true] %s26
      %29 = dma.hbm_to_vmem [thread:$0]  %s1, 256, %s27, [#allocation6]
    $region9: #{tpu_custom_call.1} parent=1 // pred_fallthru
      _
    // Predicated region
    $region10: #{tpu_custom_call.1} parent=1 // pred_check
      _
    $region11: #{tpu_custom_call.1} parent=1 // pred_check_branch
      %31 = sbr.rel (0) target = $region13
    $region12: #{tpu_custom_call.1} parent=1 // pred_region
      %32 = dma.done [#allocation3], 256
    $region13: #{tpu_custom_call.1} parent=1 // pred_fallthru
      _
    // Predicated region
    $region14: #{tpu_custom_call.1} parent=1 // pred_check
      _
    $region15: #{tpu_custom_call.1} parent=1 // pred_check_branch
      %34 = sbr.rel (0) target = $region17
    $region16: #{tpu_custom_call.1} parent=1 // pred_region
      %35 = dma.done [#allocation6], 256
    $region17: #{tpu_custom_call.1} parent=1 // pred_fallthru
      _
    %v36 = vld [vmem:[#allocation2] sm:$0xff]
    %v37 = vld [vmem:[#allocation2 + $0x8] sm:$0xff]
    %v38 = vld [vmem:[#allocation5] sm:$0xff]
    %v39 = vld [vmem:[#allocation5 + $0x8] sm:$0xff]
    %v40 = vmax.f32 %v36, %v38
    %v41 = vmax.f32 %v37, %v39
    %v42 = vadd.f32 %v40, %v40
    %v43 = vadd.f32 %v41, %v41
    %44 = vst [vmem:[#allocation7] sm:$0xff] %v42
    %45 = vst [vmem:[#allocation7 + $0x8] sm:$0xff] %v43
    // Predicated region
    $region18: #{tpu_custom_call.1} parent=1 // pred_check
      _
    $region19: #{tpu_custom_call.1} parent=1 // pred_check_branch
      %47 = sbr.rel (0) target = $region21
    $region20: #{tpu_custom_call.1} parent=1 // pred_region
      %s49 = ssub.s32 256, 256
      %50 = vsyncadd [#allocation4], %s49
      %s52 = sshll.u32 [#allocation7], 4
      %s53 = int_to_ptr.vmem [resolvable:$true] %s52
      %55 = dma.vmem_to_hbm [thread:$0]  %s53, 256, %s2, [#allocation4]
    $region21: #{tpu_custom_call.1} parent=1 // pred_fallthru
      _
    // Predicated region
    $region22: #{tpu_custom_call.1} parent=1 // pred_check
      _
    $region23: #{tpu_custom_call.1} parent=1 // pred_check_branch
      %57 = sbr.rel (0) target = $region25
    $region24: #{tpu_custom_call.1} parent=1 // pred_region
      %58 = dma.done [#allocation4], 256
    $region25: #{tpu_custom_call.1} parent=1 // pred_fallthru
      _
    %59 = vsyncpa [#allocation3], 1
    %60 = vsyncpa [#allocation6], 1
    %61 = vsyncpa [#allocation4], 1

</llo_original>
